<compile_context>
chip_gen: v6e
topology: v6e:2x2x1
jax: 0.10.0
libtpu: 0.0.40
codegen_flags: <defaults>
</compile_context>

<pallas_src>
import functools

import jax
import jax.numpy as jnp
from jax.experimental import pallas as pl
from jax.experimental.pallas import tpu as pltpu


def _round_up(v, m):
    return ((v + m - 1) // m) * m


def _vmem_capacity_bytes():
    """Physical VMEM per TensorCore (128 MiB on v5e/v6e, 64 MiB on v7x)."""
    try:
        info = pltpu.get_tpu_info()
        cap = getattr(info, "vmem_capacity_bytes", None)
        if cap:
            return int(cap)
    except Exception:
        pass
    return 64 * 1024 * 1024  # conservative default (v7x per-TC)


# ----------------------------- kernels -----------------------------

def _fused_attr_mask_kernel(x_ref, mask_ref, out_ref):
    """Whole-graph fused mean + masked row replacement (x stays in native dtype).

    x_ref:    (N, F) node features (f32 or bf16), VMEM
    mask_ref: (N, 1) int8, 1 where the row is replaced by the token
    out_ref:  (N, F), same dtype as x
    """
    x = x_ref[...]
    # f32 accumulation for the token; only the (1, F) token is cast back down.
    token = jnp.mean(x.astype(jnp.float32), axis=0, keepdims=True).astype(out_ref.dtype)
    out_ref[...] = jnp.where(mask_ref[...] != 0, token, x)


def _token_sum_kernel(x_ref, tok_ref, *, node_num, tile_n, inv_n):
    """Pass 1: accumulate per-feature f32 sums over node tiles; scale by 1/N at the end.

    grid = cdiv(N, tile_n), so the last tile may run past node_num. Boundary-block
    reads are garbage on TPU, so out-of-range rows are masked out of the sum.
    """
    i = pl.program_id(0)

    @pl.when(i == 0)
    def _():
        tok_ref[...] = jnp.zeros_like(tok_ref)

    row = i * tile_n + jax.lax.broadcasted_iota(jnp.int32, (tile_n, 1), 0)
    xf = jnp.where(row < node_num, x_ref[...].astype(jnp.float32), 0.0)
    tok_ref[...] += jnp.sum(xf, axis=0, keepdims=True)

    @pl.when(i == pl.num_programs(0) - 1)
    def _():
        tok_ref[...] = tok_ref[...] * inv_n


def _replace_kernel(x_ref, mask_ref, tok_ref, out_ref):
    """Pass 2: node-tiled masked replacement (token broadcast across the tile).

    Boundary-tile rows past node_num compute garbage, but their writes are dropped
    by Pallas, so no masking is needed here.
    """
    token = tok_ref[...].astype(out_ref.dtype)                 # (1, F)
    out_ref[...] = jnp.where(mask_ref[...] != 0, token, x_ref[...])


# ----------------------------- wrapper -----------------------------

def _build_mask(key, node_num, aug_size):
    """int8 (N, 1) mask with int(node_num*aug_size) rows set (sampled w/o replacement)."""
    mask_num = int(node_num * aug_size)
    perm = jax.random.permutation(key, node_num)
    idx_mask = perm[:mask_num]
    return jnp.zeros((node_num, 1), jnp.int8).at[idx_mask, 0].set(1)


def attr_mask_forward(x, edge_index, y, aug_size, key, *,
                      force_tiled=False, donate_x=False, max_tile_rows=None):
    """JAX/Pallas equivalent of AttrMask.forward on a single graph.

    Returns (x_masked, edge_index, y) — the Data(...) fields as a tuple.
    Set donate_x=True only if x is donated at the jit boundary (enables in-place
    aliasing of the output over x); otherwise XLA would insert a defensive copy.
    """
    node_num, feat_dim = x.shape
    mask = _build_mask(key, node_num, aug_size)
    itemsize = jnp.dtype(x.dtype).itemsize
    x_bytes = node_num * feat_dim * itemsize

    vmem_cap = _vmem_capacity_bytes()
    fused_limit = int(vmem_cap * 0.80)    # ~102 MiB on v5e/v6e, ~51 MiB on v7x
    fused_budget = int(vmem_cap * 0.70)
    tiled_limit = int(vmem_cap * 0.50)
    tile_budget = int(vmem_cap * 0.25)

    alias = {0: 0} if donate_x else {}

    # Worst-case fused footprint: x in + out + possible f32 temp for the mean + slack.
    fused_est = 2 * x_bytes + node_num * feat_dim * 4 + (2 << 20)

    # ---------- fused single-pass: whole graph resident in VMEM ----------
    if not force_tiled and fused_est <= fused_budget:
        x_masked = pl.pallas_call(
            _fused_attr_mask_kernel,
            out_shape=jax.ShapeDtypeStruct((node_num, feat_dim), x.dtype),
            in_specs=[pl.BlockSpec(memory_space=pltpu.MemorySpace.VMEM),
                      pl.BlockSpec(memory_space=pltpu.MemorySpace.VMEM)],
            out_specs=pl.BlockSpec(memory_space=pltpu.MemorySpace.VMEM),
            input_output_aliases=alias,
            compiler_params=pltpu.CompilerParams(vmem_limit_bytes=fused_limit),
        )(x, mask)
        return x_masked, edge_index, y

    # ---------- tiled two-pass: large graphs ----------
    row_bytes = feat_dim * itemsize
    target_block = 2 << 20                                    # ~2 MiB of x per tile
    tile_n = max(8, (target_block // row_bytes) // 8 * 8)
    vmem_tile_cap = max(8, (tile_budget // (4 * row_bytes)) // 8 * 8)
    tile_n = min(tile_n, vmem_tile_cap, _round_up(node_num, 8))
    if max_tile_rows is not None:
        tile_n = min(tile_n, max(8, (max_tile_rows // 8) * 8))
    num_tiles = (node_num + tile_n - 1) // tile_n

    # Pass 1: token = mean(x, axis=0) via a reduction grid axis with a VMEM-resident
    # (1, F) f32 accumulator; partial last tile masked in-kernel.
    token = pl.pallas_call(
        functools.partial(_token_sum_kernel, node_num=node_num, tile_n=tile_n,
                          inv_n=1.0 / node_num),
        out_shape=jax.ShapeDtypeStruct((1, feat_dim), jnp.float32),
        grid=(num_tiles,),
        in_specs=[pl.BlockSpec((tile_n, feat_dim), lambda i: (i, 0))],
        out_specs=pl.BlockSpec((1, feat_dim), lambda i: (0, 0)),
        compiler_params=pltpu.CompilerParams(
            dimension_semantics=("arbitrary",),
            vmem_limit_bytes=tiled_limit),
    )(x)

    # Pass 2: node-tiled masked replace; node axis is independent -> "parallel"
    # (v7x shards it across its 2 TensorCores).
    x_masked = pl.pallas_call(
        _replace_kernel,
        out_shape=jax.ShapeDtypeStruct((node_num, feat_dim), x.dtype),
        grid=(num_tiles,),
        in_specs=[
            pl.BlockSpec((tile_n, feat_dim), lambda i: (i, 0)),
            pl.BlockSpec((tile_n, 1), lambda i: (i, 0)),
            pl.BlockSpec((1, feat_dim), lambda i: (0, 0)),
        ],
        out_specs=pl.BlockSpec((tile_n, feat_dim), lambda i: (i, 0)),
        input_output_aliases=alias,
        compiler_params=pltpu.CompilerParams(
            dimension_semantics=("parallel",),
            vmem_limit_bytes=tiled_limit),
    )(x, mask, token)

    return x_masked, edge_index, y


# ----------------------------- reference & test -----------------------------

def _reference(x, mask):
    xf = x.astype(jnp.float32)
    token = jnp.mean(xf, axis=0, keepdims=True)
    return jnp.where(mask != 0, token, xf).astype(x.dtype)


if __name__ == "__main__":
    key = jax.random.PRNGKey(0)
    k1, k2, k3, k4, k5, k6 = jax.random.split(key, 6)
    aug_size = 0.2

    # --- Test 1: small graph, fused single-pass path (float32) ---
    node_num, feat_dim = 32, 128
    x = jax.random.normal(k1, (node_num, feat_dim), jnp.float32)
    edge_index = jax.random.randint(k2, (2, 64), 0, node_num, dtype=jnp.int32)
    y = jnp.array([1], dtype=jnp.int32)

    ref1 = _reference(x, _build_mask(k3, node_num, aug_size))
    x_out, ei_out, y_out = attr_mask_forward(x, edge_index, y, aug_size, k3)
    jax.block_until_ready(x_out)
    assert x_out.shape == x.shape and x_out.dtype == x.dtype
    assert jnp.allclose(x_out, ref1, atol=1e-5), "fused f32 mismatch vs reference"
    assert bool((ei_out == edge_index).all()) and bool((y_out == y).all())

    # --- Test 2: ragged shapes, tiled two-pass path (float32, multi-tile + boundary) ---
    node_num2, feat_dim2 = 1037, 200
    x2 = jax.random.normal(k4, (node_num2, feat_dim2), jnp.float32)
    ref2 = _reference(x2, _build_mask(k5, node_num2, aug_size))
    x2_out, _, _ = attr_mask_forward(x2, edge_index, y, aug_size, k5,
                                     force_tiled=True, max_tile_rows=256)
    jax.block_until_ready(x2_out)
    assert x2_out.shape == x2.shape
    assert jnp.allclose(x2_out, ref2, atol=1e-4, rtol=1e-4), "tiled mismatch vs reference"

    # --- Test 3: bf16 end-to-end (mean still accumulated in f32 in-kernel) ---
    node_num3, feat_dim3 = 64, 256
    x3 = jax.random.normal(k6, (node_num3, feat_dim3), jnp.float32).astype(jnp.bfloat16)
    ref3 = _reference(x3, _build_mask(k3, node_num3, aug_size))
    x3_out, _, _ = attr_mask_forward(x3, edge_index, y, aug_size, k3)
    jax.block_until_ready(x3_out)
    assert x3_out.dtype == jnp.bfloat16
    assert jnp.allclose(x3_out.astype(jnp.float32), ref3.astype(jnp.float32),
                        atol=3e-2), "bf16 mismatch vs reference"

    print("KERNEL_OK")
</pallas_src>

<mosaic_0001>
module attributes {stable_mosaic.version = 11 : i64} {
  func.func @_fused_attr_mask_kernel(%arg0: memref<32x128xf32, #tpu.memory_space<vmem>>, %arg1: memref<32x1xi8, #tpu.memory_space<vmem>>, %arg2: memref<32x128xf32, #tpu.memory_space<vmem>>) attributes {dimension_semantics = [], scalar_prefetch = 0 : i64, scratch_operands = 0 : i64, tpu.core_type = #tpu.core_type<tc>} {
    %c0 = arith.constant 0 : index
    %c0_0 = arith.constant 0 : index
    %0 = vector.load %arg0[%c0, %c0_0] : memref<32x128xf32, #tpu.memory_space<vmem>>, vector<32x128xf32>
    %cst = arith.constant dense<0.000000e+00> : vector<128xf32>
    %1 = vector.multi_reduction <add>, %0, %cst [0] : vector<32x128xf32> to vector<128xf32>
    %2 = vector.shape_cast %1 : vector<128xf32> to vector<1x128xf32>
    %cst_1 = arith.constant 3.200000e+01 : f32
    %3 = vector.broadcast %cst_1 : f32 to vector<1x128xf32>
    %4 = arith.divf %2, %3 : vector<1x128xf32>
    %c0_2 = arith.constant 0 : index
    %c0_3 = arith.constant 0 : index
    %5 = vector.load %arg1[%c0_2, %c0_3] : memref<32x1xi8, #tpu.memory_space<vmem>>, vector<32x1xi8>
    %c0_i8 = arith.constant 0 : i8
    %6 = vector.broadcast %c0_i8 : i8 to vector<32x1xi8>
    %7 = arith.cmpi ne, %5, %6 : vector<32x1xi8>
    %8 = vector.shape_cast %7 : vector<32x1xi1> to vector<32x1xi1>
    %9 = vector.broadcast %8 : vector<32x1xi1> to vector<32x128xi1>
    %10 = vector.shape_cast %4 : vector<1x128xf32> to vector<1x128xf32>
    %11 = vector.broadcast %10 : vector<1x128xf32> to vector<32x128xf32>
    %12 = arith.select %9, %11, %0 : vector<32x128xi1>, vector<32x128xf32>
    %c0_4 = arith.constant 0 : index
    %c0_5 = arith.constant 0 : index
    %13 = vector.load %arg2[%c0_4, %c0_5] : memref<32x128xf32, #tpu.memory_space<vmem>>, vector<32x128xf32>
    tpu.vector_store %arg2[%c0_4, %c0_5], %12 {strides = array<i32>} : memref<32x128xf32, #tpu.memory_space<vmem>>, vector<32x128xf32>,
    return
  }
}

</mosaic_0001>

<llo_original>
// kernel: tpu_custom_call.1
$region0: #{tpu_custom_call.1}
  #allocation0 [shape = 'u32[]', space=smem, size = 0x4, offset = 0x4, fixed_abs, tag = 'smem constant byte address 0x4 - core index']
  #allocation1 [shape = 'u32[144,128]{1,0:T(1,128)}', space=vmem, size = 0x12000, scoped, tag = 'internal scratch']
  %s0 = inlined_call_operand.hbm [shape: f32[32,128], index: 0, kind: input, shape index: {}]
  %s1 = inlined_call_operand.vmem [shape: s8[32,1], index: 1, kind: input, shape index: {}]
  %s2 = inlined_call_operand.hbm [shape: f32[32,128], index: 2, kind: output, shape index: {}]
  %s3 = sld [smem:[#allocation0]]
  $region22: #{tpu_custom_call.1} parent=0
    _
  %s5 = ssub.s32 1, %s3
  %s6 = scalar_select 0, %s5, %s3
  $region1: #{tpu_custom_call.1} parent=0
    #allocation2 [shape = 'u8[16384]{0}', space=vmem, size = 0x4000, scoped, tag = 'input window, operand 0, single buffered']
    #allocation3 [shape = 's32[1]{0}', space=sflag, size = 0x4, scoped, tag = 'scoped memory for tpu_custom_call.1']
    #allocation4 [shape = 's32[1]{0}', space=sflag, size = 0x4, scoped, tag = 'scoped memory for tpu_custom_call.1']
    #allocation5 [shape = 'u8[16384]{0}', space=vmem, size = 0x4000, scoped, tag = 'output window, operand 0, single buffered']
    %7 = vsyncpa [#allocation3], 0
    %8 = vsyncpa [#allocation4], 0
    // Predicated region
    $region2: #{tpu_custom_call.1} parent=1 // pred_check
      _
    $region3: #{tpu_custom_call.1} parent=1 // pred_check_branch
      %10 = sbr.rel (0) target = $region5
    $region4: #{tpu_custom_call.1} parent=1 // pred_region
      %s12 = ssub.s32 512, 512
      %13 = vsyncadd [#allocation3], %s12
      %s14 = sshll.u32 [#allocation2], 4
      %s15 = int_to_ptr.vmem [resolvable:$true] %s14
      %20 = dma.hbm_to_vmem [thread:$0]  %s0, 512, %s15, [#allocation3], 128, 128, 8
    $region5: #{tpu_custom_call.1} parent=1 // pred_fallthru
      _
    // Predicated region
    $region6: #{tpu_custom_call.1} parent=1 // pred_check
      _
    $region7: #{tpu_custom_call.1} parent=1 // pred_check_branch
      %22 = sbr.rel (0) target = $region9
    $region8: #{tpu_custom_call.1} parent=1 // pred_region
      _
    $region9: #{tpu_custom_call.1} parent=1 // pred_fallthru
      _
    // Predicated region
    $region10: #{tpu_custom_call.1} parent=1 // pred_check
      _
    $region11: #{tpu_custom_call.1} parent=1 // pred_check_branch
      %24 = sbr.rel (0) target = $region13
    $region12: #{tpu_custom_call.1} parent=1 // pred_region
      %25 = dma.done [#allocation3], 512
    $region13: #{tpu_custom_call.1} parent=1 // pred_fallthru
      _
    %v28 = vld [vmem:[#allocation2] sm:$0xff]
    %v29 = vld [vmem:[#allocation2 + $0x8] sm:$0xff]
    %v30 = vld [vmem:[#allocation2 + $0x10] sm:$0xff]
    %v31 = vld [vmem:[#allocation2 + $0x18] sm:$0xff]
    %v32 = vadd.f32 %v28, %v29
    %v33 = vadd.f32 %v32, %v30
    %v34 = vadd.f32 %v33, %v31
    %v35 = vrot.slane %v34, 4
    %v36 = vadd.f32 %v34, %v35
    %v37 = vrot.slane %v36, 2
    %v38 = vadd.f32 %v36, %v37
    %v39 = vrot.slane %v38, 1
    %v40 = vadd.f32 %v38, %v39
    %v41 = vrcp.pop 32.0
    %v42 = vmul.f32 %v40, %v41
    %v43 = vld [vmem:[%s1] sm:$0x3]
    %v44 = vld [vmem:[%s1 + $0x2] sm:$0x3]
    %v45 = vld [vmem:[%s1 + $0x4] sm:$0x3]
    %v46 = vld [vmem:[%s1 + $0x6] sm:$0x3]
    %vm47 = vnez %v43
    %vm48 = vnez %v44
    %vm49 = vnez %v45
    %vm50 = vnez %v46
    %v51 = vsel %vm47, 16843009, 0
    %v52 = vsel %vm48, 16843009, 0
    %v53 = vsel %vm49, 16843009, 0
    %v54 = vsel %vm50, 16843009, 0
    %v55 = vunpack.c.0.s8 %v51
    %v56 = vunpack.c.0.s8 %v52
    %v57 = vunpack.c.0.s8 %v53
    %v58 = vunpack.c.0.s8 %v54
    %vm59 = vcmp.ne.s32.totalorder %v55, 0
    %vm60 = vcmp.ne.s32.totalorder %v56, 0
    %vm61 = vcmp.ne.s32.totalorder %v57, 0
    %vm62 = vcmp.ne.s32.totalorder %v58, 0
    %v63 = vsel %vm59, 1, 0
    %v64 = vsel %vm60, 1, 0
    %v65 = vsel %vm61, 1, 0
    %v66 = vsel %vm62, 1, 0
    %67 = vset.pattern.permute.xlu0 0
    %68 = vperm.xlu0 %67, %v63
    %v69 = vpop.permute.xlu0 %68
    %70 = vset.pattern.permute.xlu0 0
    %71 = vperm.xlu0 %70, %v64
    %v72 = vpop.permute.xlu0 %71
    %73 = vset.pattern.permute.xlu0 0
    %74 = vperm.xlu0 %73, %v65
    %v75 = vpop.permute.xlu0 %74
    %76 = vset.pattern.permute.xlu0 0
    %77 = vperm.xlu0 %76, %v66
    %v78 = vpop.permute.xlu0 %77
    %vm79 = vcmp.eq.s32.totalorder %v69, 1
    %vm80 = vcmp.eq.s32.totalorder %v72, 1
    %vm81 = vcmp.eq.s32.totalorder %v75, 1
    %vm82 = vcmp.eq.s32.totalorder %v78, 1
    %v83 = vsel %vm79, %v42, %v28
    %v84 = vsel %vm80, %v42, %v29
    %v85 = vsel %vm81, %v42, %v30
    %v86 = vsel %vm82, %v42, %v31
    %87 = vst [vmem:[#allocation5] sm:$0xff] %v83
    %88 = vst [vmem:[#allocation5 + $0x8] sm:$0xff] %v84
    %89 = vst [vmem:[#allocation5 + $0x10] sm:$0xff] %v85
    %90 = vst [vmem:[#allocation5 + $0x18] sm:$0xff] %v86
    // Predicated region
    $region14: #{tpu_custom_call.1} parent=1 // pred_check
      _
    $region15: #{tpu_custom_call.1} parent=1 // pred_check_branch
      %92 = sbr.rel (0) target = $region17
    $region16: #{tpu_custom_call.1} parent=1 // pred_region
      %s94 = ssub.s32 512, 512
      %95 = vsyncadd [#allocation4], %s94
      %s96 = sshll.u32 [#allocation5], 4
      %s97 = int_to_ptr.vmem [resolvable:$true] %s96
      %102 = dma.vmem_to_hbm [thread:$0]  %s97, 512, %s2, [#allocation4], 128, 128, 8
    $region17: #{tpu_custom_call.1} parent=1 // pred_fallthru
      _
    // Predicated region
    $region18: #{tpu_custom_call.1} parent=1 // pred_check
      _
    $region19: #{tpu_custom_call.1} parent=1 // pred_check_branch
      %104 = sbr.rel (0) target = $region21
    $region20: #{tpu_custom_call.1} parent=1 // pred_region
      %105 = dma.done [#allocation4], 512
    $region21: #{tpu_custom_call.1} parent=1 // pred_fallthru
      _
    %106 = vsyncpa [#allocation3], 1
    %107 = vsyncpa [#allocation4], 1

</llo_original>
